<compile_context>
chip_gen: v7x
topology: tpu7x:2x2x1
jax: 0.10.0
libtpu: 0.0.40
codegen_flags: <defaults>
</compile_context>

<pallas_src>
import jax
import jax.numpy as jnp
from jax.experimental import pallas as pl
from jax.experimental.pallas import tpu as pltpu

HIDDEN = 128
OUT = 40
OUT_PADDED = 128  # lane-dense compute width inside the kernel
NEG_BIG = -1e30   # effectively -inf for softmax, avoids inf arithmetic


def policy_kernel(x_ref, sp_ref, w2_ref, o_ref):
    # x:  (TB, 1)         batch tile, feature on lane axis (width 1)
    # sp: (3, 128)        packed small params: [w1; b1; b2_padded]
    # w2: (128, 128)      (in, out) layout, zero-padded to 128 outputs
    # o:  (TB, 40)        softmax probabilities over the 40 real actions
    x = x_ref[...]                  # (TB, 1)
    w1 = sp_ref[0:1, :]             # (1, 128)
    b1 = sp_ref[1:2, :]             # (1, 128)
    b2 = sp_ref[2:3, :]             # (1, 128)  padded lanes = NEG_BIG

    # Layer 1 (K=1): VPU broadcast multiply-add instead of MXU outer product.
    # Dropout -> identity (eval mode), then ReLU.
    h = jnp.maximum(x * w1 + b1, 0.0)              # (TB, 128)

    # Layer 2: real matmul on the MXU, f32 accumulation, lane-dense (128 wide).
    s = jnp.dot(h, w2_ref[...], preferred_element_type=jnp.float32) + b2  # (TB, 128)

    # Softmax over the feature axis; padded lanes underflow to exactly 0.
    m = jnp.max(s, axis=1, keepdims=True)
    e = jnp.exp(s - m)
    denom = jnp.sum(e, axis=1, keepdims=True)      # >= 1, well conditioned
    # EUP approx reciprocal + one Newton step (keeps ~1e-7 rel error).
    r = pl.reciprocal(denom, approx=True)
    inv = r * (2.0 - denom * r)
    probs = e * inv                                # (TB, 128)

    # Only the 40 real action probabilities are written back (3.2x less HBM).
    o_ref[...] = probs[:, :OUT].astype(o_ref.dtype)


def _round_up(n, m):
    return ((n + m - 1) // m) * m


def pack_policy_params(w1, b1, w2, b2):
    """One-time parameter packing (hoisted out of the per-step hot path).

    w1: (1, 128), b1: (1, 128), w2: (128, 40), b2: (1, 40)  [(in, out) layout]
    Returns (small, w2p): small is (3, 128) = [w1; b1; b2 padded with -1e30],
    w2p is (128, 128) with zero-padded output columns.
    """
    w2p = jnp.pad(w2, ((0, 0), (0, OUT_PADDED - OUT)))                        # zeros
    b2p = jnp.pad(b2, ((0, 0), (0, OUT_PADDED - OUT)), constant_values=NEG_BIG)
    small = jnp.concatenate([w1, b1, b2p], axis=0)                            # (3, 128)
    return small, w2p


def policy_forward(x, small, w2p, *, block_b=2048):
    """x: (B, 1). small: (3, 128), w2p: (128, 128) from pack_policy_params.

    Returns softmax probabilities of shape (B, 40).
    """
    B = x.shape[0]

    # Batch tile: multiple of 8 (sublane), capped at block_b, and sized to
    # ~half the batch so large batches get >= 2 grid steps (v7x megacore).
    B8 = _round_up(B, 8)
    TB = min(block_b, _round_up((B8 + 1) // 2, 8))
    Bp = _round_up(B, TB)
    if Bp != B:
        x = jnp.pad(x, ((0, Bp - B), (0, 0)))

    grid = (Bp // TB,)
    out = pl.pallas_call(
        policy_kernel,
        out_shape=jax.ShapeDtypeStruct((Bp, OUT), jnp.float32),
        grid=grid,
        in_specs=[
            pl.BlockSpec((TB, 1), lambda i: (i, 0)),
            pl.BlockSpec((3, HIDDEN), lambda i: (0, 0)),          # VMEM-resident
            pl.BlockSpec((HIDDEN, OUT_PADDED), lambda i: (0, 0)), # VMEM-resident
        ],
        out_specs=pl.BlockSpec((TB, OUT), lambda i: (i, 0)),      # 40 == full last dim
        compiler_params=pltpu.CompilerParams(
            dimension_semantics=("parallel",),
        ),
    )(x, small, w2p)

    if Bp != B:
        out = out[:B]
    return out


def init_params(key):
    # Deterministic init mimicking PyTorch Linear default: U(-1/sqrt(fan_in), 1/sqrt(fan_in)).
    k1, k2, k3, k4 = jax.random.split(key, 4)
    bound1 = 1.0 / jnp.sqrt(1.0)      # fan_in = 1
    bound2 = 1.0 / jnp.sqrt(128.0)    # fan_in = 128
    w1 = jax.random.uniform(k1, (1, HIDDEN), jnp.float32, -bound1, bound1)  # (in, out)
    b1 = jax.random.uniform(k2, (1, HIDDEN), jnp.float32, -bound1, bound1)
    w2 = jax.random.uniform(k3, (HIDDEN, OUT), jnp.float32, -bound2, bound2)  # (in, out)
    b2 = jax.random.uniform(k4, (1, OUT), jnp.float32, -bound2, bound2)
    return w1, b1, w2, b2


def _reference(x, w1, b1, w2, b2):
    h = jnp.maximum(x @ w1 + b1, 0.0)
    return jax.nn.softmax(h @ w2 + b2, axis=1)


if __name__ == "__main__":
    key = jax.random.PRNGKey(0)
    pkey, xkey_small, xkey_big = jax.random.split(key, 3)
    w1, b1, w2, b2 = init_params(pkey)

    # Pack params once (hoisted out of the per-call hot path).
    small, w2p = pack_policy_params(w1, b1, w2, b2)
    small = jax.block_until_ready(small)
    w2p = jax.block_until_ready(w2p)

    # Small batch (matches module forward: x of shape (B, 1)).
    B = 8
    x = jax.random.normal(xkey_small, (B, 1), dtype=jnp.float32)
    out = jax.block_until_ready(policy_forward(x, small, w2p))
    ref = _reference(x, w1, b1, w2, b2)
    assert out.shape == (B, OUT)
    assert jnp.allclose(out, ref, atol=1e-5, rtol=1e-5)
    assert jnp.allclose(jnp.sum(out, axis=1), 1.0, atol=1e-5)

    # Larger batch to exercise the multi-step parallel grid (2 batch tiles).
    B2 = 1024
    x2 = jax.random.normal(xkey_big, (B2, 1), dtype=jnp.float32)
    out2 = jax.block_until_ready(policy_forward(x2, small, w2p))
    ref2 = _reference(x2, w1, b1, w2, b2)
    assert out2.shape == (B2, OUT)
    assert jnp.allclose(out2, ref2, atol=1e-5, rtol=1e-5)
    assert jnp.allclose(jnp.sum(out2, axis=1), 1.0, atol=1e-5)

    print("KERNEL_OK")
</pallas_src>

<mosaic_0001>
module attributes {stable_mosaic.version = 11 : i64} {
  func.func @policy_kernel(%arg0: i32, %arg1: memref<8x1xf32, #tpu.memory_space<vmem>>, %arg2: memref<3x128xf32, #tpu.memory_space<vmem>>, %arg3: memref<128x128xf32, #tpu.memory_space<vmem>>, %arg4: memref<8x40xf32, #tpu.memory_space<vmem>>) attributes {dimension_semantics = [#tpu.dimension_semantics<parallel>], iteration_bounds = array<i64: 1>, scalar_prefetch = 0 : i64, scratch_operands = 0 : i64, tpu.core_type = #tpu.core_type<tc>, window_params = [{transform_indices = @transform_0, window_bounds = array<i64: 8, 1>}, {pipeline_mode = #tpu.pipeline_mode<synchronous>, transform_indices = @transform_1, window_bounds = array<i64: 3, 128>}, {pipeline_mode = #tpu.pipeline_mode<synchronous>, transform_indices = @transform_2, window_bounds = array<i64: 128, 128>}, {transform_indices = @transform_3, window_bounds = array<i64: 8, 40>}]} {
    %c0 = arith.constant 0 : index
    %c0_0 = arith.constant 0 : index
    %0 = vector.load %arg1[%c0, %c0_0] : memref<8x1xf32, #tpu.memory_space<vmem>>, vector<8x1xf32>
    %c0_1 = arith.constant 0 : index
    %c0_2 = arith.constant 0 : index
    %1 = vector.load %arg2[%c0_1, %c0_2] : memref<3x128xf32, #tpu.memory_space<vmem>>, vector<1x128xf32>
    %c1 = arith.constant 1 : index
    %c0_3 = arith.constant 0 : index
    %2 = vector.load %arg2[%c1, %c0_3] : memref<3x128xf32, #tpu.memory_space<vmem>>, vector<1x128xf32>
    %c2 = arith.constant 2 : index
    %c0_4 = arith.constant 0 : index
    %3 = vector.load %arg2[%c2, %c0_4] : memref<3x128xf32, #tpu.memory_space<vmem>>, vector<1x128xf32>
    %4 = vector.broadcast %0 : vector<8x1xf32> to vector<8x128xf32>
    %5 = vector.broadcast %1 : vector<1x128xf32> to vector<8x128xf32>
    %6 = arith.mulf %4, %5 : vector<8x128xf32>
    %7 = vector.broadcast %2 : vector<1x128xf32> to vector<8x128xf32>
    %8 = arith.addf %6, %7 : vector<8x128xf32>
    %cst = arith.constant 0.000000e+00 : f32
    %9 = vector.broadcast %cst : f32 to vector<8x128xf32>
    %10 = arith.maximumf %8, %9 : vector<8x128xf32>
    %c0_5 = arith.constant 0 : index
    %c0_6 = arith.constant 0 : index
    %11 = vector.load %arg3[%c0_5, %c0_6] : memref<128x128xf32, #tpu.memory_space<vmem>>, vector<128x128xf32>
    %cst_7 = arith.constant dense<0.000000e+00> : vector<8x128xf32>
    %12 = tpu.matmul %10, %11, %cst_7 {dimension_numbers = #tpu.dot_dimension_numbers<[1], [0], [0], [1], [0, 0, 1, 1], [], []>} : vector<8x128xf32>, vector<128x128xf32>, vector<8x128xf32> -> vector<8x128xf32>
    %13 = vector.broadcast %3 : vector<1x128xf32> to vector<8x128xf32>
    %14 = arith.addf %12, %13 : vector<8x128xf32>
    %cst_8 = arith.constant dense<0xFF800000> : vector<8xf32>
    %15 = vector.multi_reduction <maximumf>, %14, %cst_8 [1] : vector<8x128xf32> to vector<8xf32>
    %16 = vector.shape_cast %15 : vector<8xf32> to vector<8x1xf32>
    %17 = vector.broadcast %16 : vector<8x1xf32> to vector<8x128xf32>
    %18 = arith.subf %14, %17 : vector<8x128xf32>
    %19 = math.exp %18 : vector<8x128xf32>
    %cst_9 = arith.constant dense<0.000000e+00> : vector<8xf32>
    %20 = vector.multi_reduction <add>, %19, %cst_9 [1] : vector<8x128xf32> to vector<8xf32>
    %21 = vector.shape_cast %20 : vector<8xf32> to vector<8x1xf32>
    %22 = tpu.reciprocal %21 {approx = true} : vector<8x1xf32> -> vector<8x1xf32>
    %23 = arith.mulf %21, %22 : vector<8x1xf32>
    %cst_10 = arith.constant 2.000000e+00 : f32
    %24 = vector.broadcast %cst_10 : f32 to vector<8x1xf32>
    %25 = arith.subf %24, %23 : vector<8x1xf32>
    %26 = arith.mulf %22, %25 : vector<8x1xf32>
    %27 = vector.broadcast %26 : vector<8x1xf32> to vector<8x128xf32>
    %28 = arith.mulf %19, %27 : vector<8x128xf32>
    %29 = vector.extract_strided_slice %28 {offsets = [0, 0], sizes = [8, 40], strides = [1, 1]} : vector<8x128xf32> to vector<8x40xf32>
    %c0_11 = arith.constant 0 : index
    %c0_12 = arith.constant 0 : index
    %30 = vector.load %arg4[%c0_11, %c0_12] : memref<8x40xf32, #tpu.memory_space<vmem>>, vector<8x40xf32>
    tpu.vector_store %arg4[%c0_11, %c0_12], %29 {strides = array<i32>} : memref<8x40xf32, #tpu.memory_space<vmem>>, vector<8x40xf32>,
    return
  }
  func.func @transform_0(%arg0: i32) -> (i32, i32) {
    %c0_i32 = arith.constant 0 : i32
    %c0_i32_0 = arith.constant 0 : i32
    return %arg0, %c0_i32 : i32, i32
  }
  func.func @transform_1(%arg0: i32) -> (i32, i32) {
    %c0_i32 = arith.constant 0 : i32
    %c0_i32_0 = arith.constant 0 : i32
    %c0_i32_1 = arith.constant 0 : i32
    return %c0_i32, %c0_i32_0 : i32, i32
  }
  func.func @transform_2(%arg0: i32) -> (i32, i32) {
    %c0_i32 = arith.constant 0 : i32
    %c0_i32_0 = arith.constant 0 : i32
    %c0_i32_1 = arith.constant 0 : i32
    return %c0_i32, %c0_i32_0 : i32, i32
  }
  func.func @transform_3(%arg0: i32) -> (i32, i32) {
    %c0_i32 = arith.constant 0 : i32
    %c0_i32_0 = arith.constant 0 : i32
    return %arg0, %c0_i32 : i32, i32
  }
}

</mosaic_0001>

<llo_original>
// kernel: tpu_custom_call.1
$region0: #{tpu_custom_call.1}
  #allocation0 [shape = 'u32[]', space=smem, size = 0x4, offset = 0x4, fixed_abs, tag = 'smem constant byte address 0x4 - core index']
  #allocation1 [shape = 'u32[144,128]{1,0:T(1,128)}', space=vmem, size = 0x12000, scoped, tag = 'internal scratch']
  %s0 = inlined_call_operand.vmem [shape: f32[8,1], index: 0, kind: input, shape index: {}]
  %s1 = inlined_call_operand.vmem [shape: f32[3,128], index: 1, kind: input, shape index: {}]
  %s2 = inlined_call_operand.hbm [shape: f32[128,128], index: 2, kind: input, shape index: {}]
  %s3 = inlined_call_operand.hbm [shape: f32[8,40], index: 3, kind: output, shape index: {}]
  %s4 = sld [smem:[#allocation0]]
  $region26: #{tpu_custom_call.1} parent=0
    _
  %s6 = ssub.s32 1, %s4
  %s7 = scalar_select 0, %s6, %s4
  $region1: #{tpu_custom_call.1} parent=0
    #allocation2 [shape = 'u8[65536]{0}', space=vmem, size = 0x10000, scoped, tag = 'input window, operand 2, single buffered']
    #allocation3 [shape = 's32[1]{0}', space=sflag, size = 0x4, scoped, tag = 'scoped memory for tpu_custom_call.1']
    #allocation4 [shape = 's32[1]{0}', space=sflag, size = 0x4, scoped, tag = 'scoped memory for tpu_custom_call.1']
    #allocation5 [shape = 'u8[4096]{0}', space=vmem, size = 0x1000, scoped, tag = 'output window, operand 0, single buffered']
    %8 = vsyncpa [#allocation3], 0
    %9 = vsyncpa [#allocation4], 0
    // Predicated region
    $region2: #{tpu_custom_call.1} parent=1 // pred_check
      _
    $region3: #{tpu_custom_call.1} parent=1 // pred_check_branch
      %11 = sbr.rel (0) target = $region5
    $region4: #{tpu_custom_call.1} parent=1 // pred_region
      _
    $region5: #{tpu_custom_call.1} parent=1 // pred_fallthru
      _
    // Predicated region
    $region6: #{tpu_custom_call.1} parent=1 // pred_check
      _
    $region7: #{tpu_custom_call.1} parent=1 // pred_check_branch
      %13 = sbr.rel (0) target = $region9
    $region8: #{tpu_custom_call.1} parent=1 // pred_region
      _
    $region9: #{tpu_custom_call.1} parent=1 // pred_fallthru
      _
    // Predicated region
    $region10: #{tpu_custom_call.1} parent=1 // pred_check
      _
    $region11: #{tpu_custom_call.1} parent=1 // pred_check_branch
      %15 = sbr.rel (0) target = $region13
    $region12: #{tpu_custom_call.1} parent=1 // pred_region
      %s17 = ssub.s32 2048, 2048
      %18 = vsyncadd [#allocation3], %s17
      %s19 = sshll.u32 [#allocation2], 4
      %s20 = int_to_ptr.vmem [resolvable:$true] %s19
      %25 = dma.hbm_to_vmem [thread:$0]  %s2, 2048, %s20, [#allocation3], 128, 128, 8
    $region13: #{tpu_custom_call.1} parent=1 // pred_fallthru
      _
    // Predicated region
    $region14: #{tpu_custom_call.1} parent=1 // pred_check
      _
    $region15: #{tpu_custom_call.1} parent=1 // pred_check_branch
      %27 = sbr.rel (0) target = $region17
    $region16: #{tpu_custom_call.1} parent=1 // pred_region
      %28 = dma.done [#allocation3], 2048
    $region17: #{tpu_custom_call.1} parent=1 // pred_fallthru
      _
    %v29 = vld [vmem:[%s0] sm:$0xff]
    %v30 = vld [vmem:[%s1] sm:$0x1]
    %v31 = vld [vmem:[%s1 + $0x1] sm:$0x1]
    %v32 = vld [vmem:[%s1 + $0x2] sm:$0x1]
    %34 = vset.pattern.permute.xlu0 0
    %35 = vperm.xlu0 %34, %v29
    %v36 = vpop.permute.xlu0 %35
    %v38 = vlaneseq
    %v39 = vshrl.u32 %v38, 7
    %v40 = vsub.s32 0, %v39
    %v41 = vrot.slane %v30, %v40
    %v42 = vmul.f32 %v36, %v41
    %v43 = vlaneseq
    %v44 = vshrl.u32 %v43, 7
    %v45 = vsub.s32 0, %v44
    %v46 = vrot.slane %v31, %v45
    %v47 = vadd.f32 %v42, %v46
    %v48 = vmax.f32 %v47, 0.0
    %v49 = vld [vmem:[#allocation2] sm:$0xff]
    %v50 = vld [vmem:[#allocation2 + $0x8] sm:$0xff]
    %v51 = vld [vmem:[#allocation2 + $0x10] sm:$0xff]
    %v52 = vld [vmem:[#allocation2 + $0x18] sm:$0xff]
    %v53 = vld [vmem:[#allocation2 + $0x20] sm:$0xff]
    %v54 = vld [vmem:[#allocation2 + $0x28] sm:$0xff]
    %v55 = vld [vmem:[#allocation2 + $0x30] sm:$0xff]
    %v56 = vld [vmem:[#allocation2 + $0x38] sm:$0xff]
    %v57 = vld [vmem:[#allocation2 + $0x40] sm:$0xff]
    %v58 = vld [vmem:[#allocation2 + $0x48] sm:$0xff]
    %v59 = vld [vmem:[#allocation2 + $0x50] sm:$0xff]
    %v60 = vld [vmem:[#allocation2 + $0x58] sm:$0xff]
    %v61 = vld [vmem:[#allocation2 + $0x60] sm:$0xff]
    %v62 = vld [vmem:[#allocation2 + $0x68] sm:$0xff]
    %v63 = vld [vmem:[#allocation2 + $0x70] sm:$0xff]
    %v64 = vld [vmem:[#allocation2 + $0x78] sm:$0xff]
    %v65 = vlaneseq
    %v66 = vshrl.u32 %v65, 7
    %v67 = vsub.s32 0, %v66
    %v68 = vrot.slane %v32, %v67
    %69 = vmatprep.subr.mxu0 0.0
    %70 = vmatpush1.msra.mxu0 %v49
    %71 = vmatprep.subr.mxu0 0.0
    %72 = vmatpush1.msra.mxu0 %v50
    %73 = vmatprep.subr.mxu0 0.0
    %74 = vmatpush1.msra.mxu0 %v51
    %75 = vmatprep.subr.mxu0 0.0
    %76 = vmatpush1.msra.mxu0 %v52
    %77 = vmatprep.subr.mxu0 0.0
    %78 = vmatpush1.msra.mxu0 %v53
    %79 = vmatprep.subr.mxu0 0.0
    %80 = vmatpush1.msra.mxu0 %v54
    %81 = vmatprep.subr.mxu0 0.0
    %82 = vmatpush1.msra.mxu0 %v55
    %83 = vmatprep.subr.mxu0 0.0
    %84 = vmatpush1.msra.mxu0 %v56
    %85 = vmatprep.subr.mxu0 0.0
    %86 = vmatpush1.msra.mxu0 %v57
    %87 = vmatprep.subr.mxu0 0.0
    %88 = vmatpush1.msra.mxu0 %v58
    %89 = vmatprep.subr.mxu0 0.0
    %90 = vmatpush1.msra.mxu0 %v59
    %91 = vmatprep.subr.mxu0 0.0
    %92 = vmatpush1.msra.mxu0 %v60
    %93 = vmatprep.subr.mxu0 0.0
    %94 = vmatpush1.msra.mxu0 %v61
    %95 = vmatprep.subr.mxu0 0.0
    %96 = vmatpush1.msra.mxu0 %v62
    %97 = vmatprep.subr.mxu0 0.0
    %98 = vmatpush1.msra.mxu0 %v63
    %99 = vmatprep.subr.mxu0 0.0
    %100 = vmatpush1.msra.mxu0 %v64
    %101 = vmatprep.subr.mxu0 0.0
    %102 = vmatpush1.msra.mxu0 0.0
    %103 = vmatprep.subr.mxu0 0.0
    %104 = vmatpush1.msra.mxu0 0.0
    %105 = vmatprep.subr.mxu0 0.0
    %106 = vmatpush1.msra.mxu0 0.0
    %107 = vmatprep.subr.mxu0 0.0
    %108 = vmatpush1.msra.mxu0 0.0
    %109 = vmatprep.subr.mxu0 0.0
    %110 = vmatpush1.msra.mxu0 0.0
    %111 = vmatprep.subr.mxu0 0.0
    %112 = vmatpush1.msra.mxu0 0.0
    %113 = vmatprep.subr.mxu0 0.0
    %114 = vmatpush1.msra.mxu0 0.0
    %115 = vmatprep.subr.mxu0 0.0
    %116 = vmatpush1.msra.mxu0 0.0
    %117 = vmatprep.subr.mxu0 0.0
    %118 = vmatpush1.msra.mxu0 0.0
    %119 = vmatprep.subr.mxu0 0.0
    %120 = vmatpush1.msra.mxu0 0.0
    %121 = vmatprep.subr.mxu0 0.0
    %122 = vmatpush1.msra.mxu0 0.0
    %123 = vmatprep.subr.mxu0 0.0
    %124 = vmatpush1.msra.mxu0 0.0
    %125 = vmatprep.subr.mxu0 0.0
    %126 = vmatpush1.msra.mxu0 0.0
    %127 = vmatprep.subr.mxu0 0.0
    %128 = vmatpush1.msra.mxu0 0.0
    %129 = vmatprep.subr.mxu0 0.0
    %130 = vmatpush1.msra.mxu0 0.0
    %131 = vmatprep.subr.mxu0 0.0
    %132 = vmatpush1.msra.mxu0 0.0
    %133 = vmatprep.mubr.f32.mxu0 0.0
    %134 = vmatmul.mubr.f32.gmra.mrb[0].mxu0 %v48
    %v135 = vpop.f32.mrb[0].mxu0
    %v136 = vadd.f32 %v68, %v135
    %v137 = vpop.f32.mrb[0].mxu0
    %138 = vdwg.mxu0
    %139 = vmax.xlane.f32.xlu0 %v136
    %v140 = vpop.xlane.xlu0 %139
    %v141 = vsub.f32 %v136, %v140
    %v142 = vmul.f32 %v141, 1.442695
    %v143 = vpow.pop %v142
    %144 = vadd.xlane.f32.xlu0 %v143
    %v145 = vpop.xlane.xlu0 %144
    %v146 = vrcp.pop %v145
    %v147 = vmul.f32 %v145, %v146
    %v148 = vsub.f32 2.0, %v147
    %v149 = vmul.f32 %v146, %v148
    %v150 = vmul.f32 %v143, %v149
    %vm151 = vcmask 326656
    %152 = vst.msk [vmem:[#allocation5] sm:$0xff] %vm151, %v150
    // Predicated region
    $region18: #{tpu_custom_call.1} parent=1 // pred_check
      _
    $region19: #{tpu_custom_call.1} parent=1 // pred_check_branch
      %154 = sbr.rel (0) target = $region21
    $region20: #{tpu_custom_call.1} parent=1 // pred_region
      %s156 = ssub.s32 128, 128
      %157 = vsyncadd [#allocation4], %s156
      %s159 = sshll.u32 [#allocation5], 4
      %s160 = int_to_ptr.vmem [resolvable:$true] %s159
      %162 = dma.vmem_to_hbm [thread:$0]  %s160, 128, %s3, [#allocation4]
    $region21: #{tpu_custom_call.1} parent=1 // pred_fallthru
      _
    // Predicated region
    $region22: #{tpu_custom_call.1} parent=1 // pred_check
      _
    $region23: #{tpu_custom_call.1} parent=1 // pred_check_branch
      %164 = sbr.rel (0) target = $region25
    $region24: #{tpu_custom_call.1} parent=1 // pred_region
      %165 = dma.done [#allocation4], 128
    $region25: #{tpu_custom_call.1} parent=1 // pred_fallthru
      _
    %166 = vsyncpa [#allocation3], 1
    %167 = vsyncpa [#allocation4], 1

</llo_original>
